<compile_context>
chip_gen: v6e
topology: v6e:2x2x1
jax: 0.10.0
libtpu: 0.0.40
codegen_flags: <defaults>
</compile_context>

<pallas_src>
import functools

import jax
import jax.numpy as jnp
from jax.experimental import pallas as pl
from jax.experimental.pallas import tpu as pltpu


def _patch_embed_kernel(patches_ref, w_ref, bias_ref, out_ref, *, bt, n):
    e = w_ref.shape[1]
    # One MXU matmul covering all `bt` images of this block (bt*n rows),
    # accumulated in f32.  BN scale is pre-folded into w_ref.
    proj = jnp.dot(patches_ref[...], w_ref[...],
                   preferred_element_type=jnp.float32)            # (bt*n, E)
    # bias = positions[patch rows] + (BN shift + folded conv bias), f32.
    proj = proj.reshape(bt, n, e) + bias_ref[...][None]
    out_ref[...] = proj.astype(out_ref.dtype)                     # aligned store


def _choose_bt(batch, n, k, e, *, in_itemsize, out_itemsize=4,
               row_align=8, min_rows_per_step=512, vmem_budget=10 << 20):
    """Pick batch elements per grid step.

    Policy (per perf review, generation-agnostic):
      * one grid step whenever the whole batch fits the VMEM budget and total
        work is small (< 2*min_rows_per_step rows) — splitting a microsecond
        kernel on single-TC v5e/v6e only adds ~0.35us pipeline steps;
      * otherwise the largest fitting block; a >=2-step split (v7x megacore)
        is only taken if each step still has >= min_rows_per_step rows;
      * flattened row count per block must be a multiple of `row_align`
        sublanes unless the block covers the whole array;
      * fallback is the full batch (always a legal block).
    """
    def legal(d):
        return d == batch or (d * n) % row_align == 0

    def vmem_bytes(d):    # double-buffered patches-in + out blocks
        return 2 * d * n * (k * in_itemsize + e * out_itemsize)

    divisors = [d for d in range(1, batch + 1) if batch % d == 0]
    fitting = [d for d in divisors if legal(d) and vmem_bytes(d) <= vmem_budget]
    if not fitting:
        legal_divs = [d for d in divisors if legal(d)]
        return min(legal_divs) if legal_divs else batch
    best = max(fitting)
    if best == batch and batch * n >= 2 * min_rows_per_step:
        split = [d for d in fitting
                 if batch // d >= 2 and d * n >= min_rows_per_step]
        if split:
            return max(split)
    return best


def patch_embedding(x, conv_w, conv_b, bn_gamma, bn_beta, bn_mean, bn_var,
                    cls_a, cls_b, positions, *, patch_size_x, patch_size_y,
                    eps=1e-5, compute_dtype=None):
    """PatchEmbedding forward (eval-mode BN).

    compute_dtype: dtype of the MXU operands (patches / folded weight).
      None keeps the input dtype (exact f32 reference numerics);
      jnp.bfloat16 is recommended on v6e/v7x (bf16-native MXU, half the DMA
      bytes for the dominant patches stream).
    """
    B, C, H, W = x.shape
    px, py = patch_size_x, patch_size_y
    nh, nw = H // px, W // py
    E = conv_w.shape[0]
    K = C * px * py
    N = nh * nw
    f32 = jnp.float32
    compute_dtype = jnp.dtype(x.dtype) if compute_dtype is None else jnp.dtype(compute_dtype)

    # --- Fold conv bias + eval-mode BatchNorm -------------------------------
    scale = (bn_gamma / jnp.sqrt(bn_var + eps)).astype(f32)              # (E,)
    shift = (bn_beta + (conv_b - bn_mean) * scale).astype(f32)           # (E,)
    w_scaled = ((conv_w.reshape(E, K).astype(f32) * scale[:, None]).T
                ).astype(compute_dtype)                                  # (K, E)

    # --- Patch extraction: non-overlapping strided conv == reshape + matmul -
    # Feature order (c, kx, ky) matches conv_w[e, c, kx, ky] flattening.
    patches = (x.reshape(B, C, nh, px, nw, py)
                 .transpose(0, 2, 4, 1, 3, 5)
                 .reshape(B * N, K)
                 .astype(compute_dtype))

    cls_a2, cls_b2 = cls_a[0], cls_b[0]                  # (na, E), (nb, E)
    na, nb = cls_a2.shape[0], cls_b2.shape[0]
    seq = N + na + nb
    assert positions.shape == (seq, E), (positions.shape, seq, E)
    positions = positions.astype(f32)

    # Positions + BN shift for the patch-token rows (stays resident in VMEM,
    # added in the kernel epilogue).  cls rows are batch-invariant -> wrapper.
    patch_bias = positions[na:na + N] + shift[None, :]                   # (N, E)

    row_align = 16 if compute_dtype == jnp.dtype(jnp.bfloat16) else 8
    Bt = _choose_bt(B, N, K, E,
                    in_itemsize=compute_dtype.itemsize,
                    out_itemsize=jnp.dtype(x.dtype).itemsize,
                    row_align=row_align)
    kernel = functools.partial(_patch_embed_kernel, bt=Bt, n=N)

    patch_tokens = pl.pallas_call(
        kernel,
        out_shape=jax.ShapeDtypeStruct((B, N, E), x.dtype),
        grid_spec=pltpu.PrefetchScalarGridSpec(
            num_scalar_prefetch=0,
            grid=(B // Bt,),
            in_specs=[
                pl.BlockSpec((Bt * N, K), lambda b: (b, 0)),   # patch rows
                pl.BlockSpec((K, E), lambda b: (0, 0)),        # BN-folded weight
                pl.BlockSpec((N, E), lambda b: (0, 0)),        # pos + shift rows
            ],
            out_specs=pl.BlockSpec((Bt, N, E), lambda b: (b, 0, 0)),
        ),
        compiler_params=pltpu.CompilerParams(
            dimension_semantics=("parallel",),
            # Let XLA fold the patch reshape/transpose (+cast) into the input
            # DMA instead of materializing a second copy of x in HBM.
            allow_input_fusion=[True, False, False],
        ),
    )(patches, w_scaled, patch_bias)

    # Batch-invariant cls + position rows: pure layout plumbing, assembled
    # once in the wrapper so every kernel store stays aligned and only covers
    # bytes the kernel actually computes.
    head = jnp.broadcast_to((cls_a2.astype(f32) + positions[:na])[None],
                            (B, na, E)).astype(x.dtype)
    tail = jnp.broadcast_to((cls_b2.astype(f32) + positions[na + N:])[None],
                            (B, nb, E)).astype(x.dtype)
    return jnp.concatenate([head, patch_tokens, tail], axis=1)


def reference(x, conv_w, conv_b, bn_gamma, bn_beta, bn_mean, bn_var,
              cls_a, cls_b, positions, *, patch_size_x, patch_size_y, eps=1e-5):
    B = x.shape[0]
    E = conv_w.shape[0]
    y = jax.lax.conv_general_dilated(
        x, conv_w, window_strides=(patch_size_x, patch_size_y),
        padding="VALID", dimension_numbers=("NCHW", "OIHW", "NCHW"))
    y = y + conv_b.reshape(1, E, 1, 1)
    y = ((y - bn_mean.reshape(1, E, 1, 1))
         / jnp.sqrt(bn_var.reshape(1, E, 1, 1) + eps)
         * bn_gamma.reshape(1, E, 1, 1) + bn_beta.reshape(1, E, 1, 1))
    y = y.reshape(B, E, -1).transpose(0, 2, 1)           # b e h w -> b (h w) e
    na, nb = cls_a.shape[1], cls_b.shape[1]
    y = jnp.concatenate([jnp.broadcast_to(cls_a, (B, na, E)), y,
                         jnp.broadcast_to(cls_b, (B, nb, E))], axis=1)
    return y + positions[None]


if __name__ == "__main__":
    # Small config consistent with the module's constraints:
    # in_channels=4, patch=(1,6), emb=32, img_size=48, num_cls_tokens=6
    # -> H must equal patch_size_x (=1), W = img_size (=48), seq = 48//6+6 = 14.
    B, C, H, W = 8, 4, 1, 48
    px, py = 1, 6
    E = 32
    num_cls = 6
    seq = W // py + num_cls

    key = jax.random.PRNGKey(0)
    ks = jax.random.split(key, 10)
    x = jax.random.normal(ks[0], (B, C, H, W), jnp.float32)
    conv_w = jax.random.normal(ks[1], (E, C, px, py), jnp.float32) * 0.1
    conv_b = jax.random.normal(ks[2], (E,), jnp.float32) * 0.1
    bn_gamma = 1.0 + 0.1 * jax.random.normal(ks[3], (E,), jnp.float32)
    bn_beta = 0.1 * jax.random.normal(ks[4], (E,), jnp.float32)
    bn_mean = 0.1 * jax.random.normal(ks[5], (E,), jnp.float32)
    bn_var = jnp.abs(jax.random.normal(ks[6], (E,), jnp.float32)) + 0.5
    cls_a = jax.random.normal(ks[7], (1, num_cls // 2, E), jnp.float32)
    cls_b = jax.random.normal(ks[8], (1, num_cls // 2, E), jnp.float32)
    positions = jax.random.normal(ks[9], (seq, E), jnp.float32)

    args = (x, conv_w, conv_b, bn_gamma, bn_beta, bn_mean, bn_var,
            cls_a, cls_b, positions)
    ref = reference(*args, patch_size_x=px, patch_size_y=py)

    # f32 operands: exact module numerics.
    out = patch_embedding(*args, patch_size_x=px, patch_size_y=py)
    out = jax.block_until_ready(out)
    assert out.shape == (B, seq, E), out.shape
    assert jnp.allclose(out, ref, rtol=1e-4, atol=1e-4), \
        float(jnp.max(jnp.abs(out - ref)))

    # bf16 MXU operands (recommended on v6e/v7x); f32 accumulate + epilogue.
    out_bf16 = jax.block_until_ready(
        patch_embedding(*args, patch_size_x=px, patch_size_y=py,
                        compute_dtype=jnp.bfloat16))
    assert out_bf16.shape == (B, seq, E), out_bf16.shape
    assert jnp.allclose(out_bf16, ref, rtol=5e-2, atol=1e-1), \
        float(jnp.max(jnp.abs(out_bf16 - ref)))

    print("KERNEL_OK")
</pallas_src>

<mosaic_0001>
module attributes {stable_mosaic.version = 11 : i64} {
  func.func @_patch_embed_kernel(%arg0: i32, %arg1: memref<64x24xf32, #tpu.memory_space<vmem>>, %arg2: memref<24x32xf32, #tpu.memory_space<vmem>>, %arg3: memref<8x32xf32, #tpu.memory_space<vmem>>, %arg4: memref<8x8x32xf32, #tpu.memory_space<vmem>>) attributes {dimension_semantics = [#tpu.dimension_semantics<parallel>], iteration_bounds = array<i64: 1>, scalar_prefetch = 0 : i64, scratch_operands = 0 : i64, tpu.core_type = #tpu.core_type<tc>, window_params = [{transform_indices = @transform_0, window_bounds = array<i64: 64, 24>}, {pipeline_mode = #tpu.pipeline_mode<synchronous>, transform_indices = @transform_1, window_bounds = array<i64: 24, 32>}, {pipeline_mode = #tpu.pipeline_mode<synchronous>, transform_indices = @transform_2, window_bounds = array<i64: 8, 32>}, {transform_indices = @transform_3, window_bounds = array<i64: 8, 8, 32>}]} {
    %c0 = arith.constant 0 : index
    %c0_0 = arith.constant 0 : index
    %0 = vector.load %arg1[%c0, %c0_0] : memref<64x24xf32, #tpu.memory_space<vmem>>, vector<64x24xf32>
    %c0_1 = arith.constant 0 : index
    %c0_2 = arith.constant 0 : index
    %1 = vector.load %arg2[%c0_1, %c0_2] : memref<24x32xf32, #tpu.memory_space<vmem>>, vector<24x32xf32>
    %cst = arith.constant dense<0.000000e+00> : vector<64x32xf32>
    %2 = tpu.matmul %0, %1, %cst {dimension_numbers = #tpu.dot_dimension_numbers<[1], [0], [0], [1], [0, 0, 1, 1], [], []>} : vector<64x24xf32>, vector<24x32xf32>, vector<64x32xf32> -> vector<64x32xf32>
    %3 = vector.shape_cast %2 : vector<64x32xf32> to vector<8x8x32xf32>
    %c0_3 = arith.constant 0 : index
    %c0_4 = arith.constant 0 : index
    %4 = vector.load %arg3[%c0_3, %c0_4] : memref<8x32xf32, #tpu.memory_space<vmem>>, vector<8x32xf32>
    %5 = vector.shape_cast %4 : vector<8x32xf32> to vector<1x8x32xf32>
    %6 = vector.broadcast %5 : vector<1x8x32xf32> to vector<8x8x32xf32>
    %7 = arith.addf %3, %6 : vector<8x8x32xf32>
    %c0_5 = arith.constant 0 : index
    %c0_6 = arith.constant 0 : index
    %c0_7 = arith.constant 0 : index
    %8 = vector.load %arg4[%c0_5, %c0_6, %c0_7] : memref<8x8x32xf32, #tpu.memory_space<vmem>>, vector<8x8x32xf32>
    tpu.vector_store %arg4[%c0_5, %c0_6, %c0_7], %7 {strides = array<i32>} : memref<8x8x32xf32, #tpu.memory_space<vmem>>, vector<8x8x32xf32>,
    return
  }
  func.func @transform_0(%arg0: i32) -> (i32, i32) {
    %c0_i32 = arith.constant 0 : i32
    %c0_i32_0 = arith.constant 0 : i32
    return %arg0, %c0_i32 : i32, i32
  }
  func.func @transform_1(%arg0: i32) -> (i32, i32) {
    %c0_i32 = arith.constant 0 : i32
    %c0_i32_0 = arith.constant 0 : i32
    %c0_i32_1 = arith.constant 0 : i32
    return %c0_i32, %c0_i32_0 : i32, i32
  }
  func.func @transform_2(%arg0: i32) -> (i32, i32) {
    %c0_i32 = arith.constant 0 : i32
    %c0_i32_0 = arith.constant 0 : i32
    %c0_i32_1 = arith.constant 0 : i32
    return %c0_i32, %c0_i32_0 : i32, i32
  }
  func.func @transform_3(%arg0: i32) -> (i32, i32, i32) {
    %c0_i32 = arith.constant 0 : i32
    %c0_i32_0 = arith.constant 0 : i32
    %c0_i32_1 = arith.constant 0 : i32
    return %arg0, %c0_i32, %c0_i32_0 : i32, i32, i32
  }
}

</mosaic_0001>

<llo_original>
// kernel: tpu_custom_call.1
$region0: #{tpu_custom_call.1}
  #allocation0 [shape = 'u32[]', space=smem, size = 0x4, offset = 0x4, fixed_abs, tag = 'smem constant byte address 0x4 - core index']
  #allocation1 [shape = 'u32[144,128]{1,0:T(1,128)}', space=vmem, size = 0x12000, scoped, tag = 'internal scratch']
  %s0 = inlined_call_operand.vmem [shape: f32[64,24], index: 0, kind: input, shape index: {}]
  %s1 = inlined_call_operand.vmem [shape: f32[24,32], index: 1, kind: input, shape index: {}]
  %s2 = inlined_call_operand.vmem [shape: f32[8,32], index: 2, kind: input, shape index: {}]
  %s3 = inlined_call_operand.hbm [shape: f32[8,8,32], index: 3, kind: output, shape index: {}]
  %s4 = sld [smem:[#allocation0]]
  $region22: #{tpu_custom_call.1} parent=0
    _
  %s6 = ssub.s32 1, %s4
  %s7 = scalar_select 0, %s6, %s4
  $region1: #{tpu_custom_call.1} parent=0
    #allocation2 [shape = 'u8[32768]{0}', space=vmem, size = 0x8000, scoped, tag = 'output window, operand 0, single buffered']
    #allocation3 [shape = 's32[1]{0}', space=sflag, size = 0x4, scoped, tag = 'scoped memory for tpu_custom_call.1']
    %8 = vsyncpa [#allocation3], 0
    // Predicated region
    $region2: #{tpu_custom_call.1} parent=1 // pred_check
      _
    $region3: #{tpu_custom_call.1} parent=1 // pred_check_branch
      %10 = sbr.rel (0) target = $region5
    $region4: #{tpu_custom_call.1} parent=1 // pred_region
      _
    $region5: #{tpu_custom_call.1} parent=1 // pred_fallthru
      _
    // Predicated region
    $region6: #{tpu_custom_call.1} parent=1 // pred_check
      _
    $region7: #{tpu_custom_call.1} parent=1 // pred_check_branch
      %12 = sbr.rel (0) target = $region9
    $region8: #{tpu_custom_call.1} parent=1 // pred_region
      _
    $region9: #{tpu_custom_call.1} parent=1 // pred_fallthru
      _
    // Predicated region
    $region10: #{tpu_custom_call.1} parent=1 // pred_check
      _
    $region11: #{tpu_custom_call.1} parent=1 // pred_check_branch
      %14 = sbr.rel (0) target = $region13
    $region12: #{tpu_custom_call.1} parent=1 // pred_region
      _
    $region13: #{tpu_custom_call.1} parent=1 // pred_fallthru
      _
    %v15 = vld [vmem:[%s0] sm:$0xff]
    %v16 = vld [vmem:[%s0 + $0x8] sm:$0xff]
    %v17 = vld [vmem:[%s0 + $0x10] sm:$0xff]
    %v18 = vld [vmem:[%s0 + $0x18] sm:$0xff]
    %v19 = vld [vmem:[%s0 + $0x20] sm:$0xff]
    %v20 = vld [vmem:[%s0 + $0x28] sm:$0xff]
    %v21 = vld [vmem:[%s0 + $0x30] sm:$0xff]
    %v22 = vld [vmem:[%s0 + $0x38] sm:$0xff]
    %v23 = vld [vmem:[%s1] sm:$0xff]
    %v24 = vld [vmem:[%s1 + $0x8] sm:$0xff]
    %v25 = vld [vmem:[%s1 + $0x10] sm:$0xff]
    %vm26 = vcmask 195584
    %v28 = vsel %vm26, %v15, 0
    %v31 = vsel %vm26, %v16, 0
    %v34 = vsel %vm26, %v17, 0
    %v37 = vsel %vm26, %v18, 0
    %v40 = vsel %vm26, %v19, 0
    %v43 = vsel %vm26, %v20, 0
    %v46 = vsel %vm26, %v21, 0
    %v49 = vsel %vm26, %v22, 0
    %51 = vmatprep.subr.mxu0 0.0
    %52 = vmatpush1.msra.mxu0 0.0
    %53 = vmatprep.subr.mxu0 0.0
    %54 = vmatpush1.msra.mxu0 0.0
    %55 = vmatprep.subr.mxu0 0.0
    %56 = vmatpush1.msra.mxu0 0.0
    %57 = vmatprep.subr.mxu0 0.0
    %58 = vmatpush1.msra.mxu0 0.0
    %59 = vmatprep.subr.mxu0 0.0
    %60 = vmatpush1.msra.mxu0 0.0
    %61 = vmatprep.subr.mxu0 0.0
    %62 = vmatpush1.msra.mxu0 0.0
    %63 = vmatprep.subr.mxu0 0.0
    %64 = vmatpush1.msra.mxu0 0.0
    %65 = vmatprep.subr.mxu0 0.0
    %66 = vmatpush1.msra.mxu0 0.0
    %67 = vmatprep.subr.mxu0 0.0
    %68 = vmatpush1.msra.mxu0 0.0
    %69 = vmatprep.subr.mxu0 0.0
    %70 = vmatpush1.msra.mxu0 0.0
    %71 = vmatprep.subr.mxu0 0.0
    %72 = vmatpush1.msra.mxu0 0.0
    %73 = vmatprep.subr.mxu0 0.0
    %74 = vmatpush1.msra.mxu0 0.0
    %75 = vmatprep.subr.mxu0 0.0
    %76 = vmatpush1.msra.mxu0 0.0
    %77 = vmatprep.subr.mxu0 0.0
    %78 = vmatpush1.msra.mxu0 %v25
    %79 = vmatprep.subr.mxu0 0.0
    %80 = vmatpush1.msra.mxu0 %v24
    %81 = vmatprep.subr.mxu0 0.0
    %82 = vmatpush1.msra.mxu0 %v23
    %83 = vmatprep.subr.mxu0 0.0
    %84 = vmatpush2.msra.mxu0 0.0
    %85 = vmatprep.subr.mxu0 0.0
    %86 = vmatpush2.msra.mxu0 0.0
    %87 = vmatprep.subr.mxu0 0.0
    %88 = vmatpush2.msra.mxu0 0.0
    %89 = vmatprep.subr.mxu0 0.0
    %90 = vmatpush2.msra.mxu0 0.0
    %91 = vmatprep.subr.mxu0 0.0
    %92 = vmatpush2.msra.mxu0 0.0
    %93 = vmatprep.subr.mxu0 0.0
    %94 = vmatpush2.msra.mxu0 0.0
    %95 = vmatprep.subr.mxu0 0.0
    %96 = vmatpush2.msra.mxu0 0.0
    %97 = vmatprep.subr.mxu0 0.0
    %98 = vmatpush2.msra.mxu0 0.0
    %99 = vmatprep.subr.mxu0 0.0
    %100 = vmatpush2.msra.mxu0 0.0
    %101 = vmatprep.subr.mxu0 0.0
    %102 = vmatpush2.msra.mxu0 0.0
    %103 = vmatprep.subr.mxu0 0.0
    %104 = vmatpush2.msra.mxu0 0.0
    %105 = vmatprep.subr.mxu0 0.0
    %106 = vmatpush2.msra.mxu0 0.0
    %107 = vmatprep.subr.mxu0 0.0
    %108 = vmatpush2.msra.mxu0 0.0
    %109 = vmatprep.subr.mxu0 0.0
    %110 = vmatpush2.msra.mxu0 0.0
    %111 = vmatprep.subr.mxu0 0.0
    %112 = vmatpush2.msra.mxu0 0.0
    %113 = vmatprep.subr.mxu0 0.0
    %114 = vmatpush2.msra.mxu0 0.0
    %115 = vmatprep.mubr.f32.mxu0 0.0
    %116 = vmatmul.mubr.f32.gmra.mxu0 %v28
    %v117 = vpop.f32.mrf.mxu0
    %v118 = vadd.f32 0.0, %v117
    %v119 = vpop.f32.mrf.mxu0
    %120 = vmatprep.mubr.f32.mxu0 0.0
    %121 = vmatmul.mubr.f32.gmra.mxu0 %v31
    %v122 = vpop.f32.mrf.mxu0
    %v123 = vadd.f32 0.0, %v122
    %v124 = vpop.f32.mrf.mxu0
    %125 = vmatprep.mubr.f32.mxu0 0.0
    %126 = vmatmul.mubr.f32.gmra.mxu0 %v34
    %v127 = vpop.f32.mrf.mxu0
    %v128 = vadd.f32 0.0, %v127
    %v129 = vpop.f32.mrf.mxu0
    %130 = vmatprep.mubr.f32.mxu0 0.0
    %131 = vmatmul.mubr.f32.gmra.mxu0 %v37
    %v132 = vpop.f32.mrf.mxu0
    %v133 = vadd.f32 0.0, %v132
    %v134 = vpop.f32.mrf.mxu0
    %135 = vmatprep.mubr.f32.mxu0 0.0
    %136 = vmatmul.mubr.f32.gmra.mxu0 %v40
    %v137 = vpop.f32.mrf.mxu0
    %v138 = vadd.f32 0.0, %v137
    %v139 = vpop.f32.mrf.mxu0
    %140 = vmatprep.mubr.f32.mxu0 0.0
    %141 = vmatmul.mubr.f32.gmra.mxu0 %v43
    %v142 = vpop.f32.mrf.mxu0
    %v143 = vadd.f32 0.0, %v142
    %v144 = vpop.f32.mrf.mxu0
    %145 = vmatprep.mubr.f32.mxu0 0.0
    %146 = vmatmul.mubr.f32.gmra.mxu0 %v46
    %v147 = vpop.f32.mrf.mxu0
    %v148 = vadd.f32 0.0, %v147
    %v149 = vpop.f32.mrf.mxu0
    %150 = vmatprep.mubr.f32.mxu0 0.0
    %151 = vmatmul.mubr.f32.gmra.mxu0 %v49
    %v152 = vpop.f32.mrf.mxu0
    %v153 = vadd.f32 0.0, %v152
    %v154 = vpop.f32.mrf.mxu0
    %155 = vdwg.mxu0
    %v156 = vld [vmem:[%s2] sm:$0xff]
    %v157 = vadd.f32 %v118, %v156
    %v158 = vadd.f32 %v123, %v156
    %v159 = vadd.f32 %v128, %v156
    %v160 = vadd.f32 %v133, %v156
    %v161 = vadd.f32 %v138, %v156
    %v162 = vadd.f32 %v143, %v156
    %v163 = vadd.f32 %v148, %v156
    %v164 = vadd.f32 %v153, %v156
    %vm165 = vcmask 261120
    %166 = vst.msk [vmem:[#allocation2] sm:$0xff] %vm165, %v157
    %167 = vst.msk [vmem:[#allocation2 + $0x8] sm:$0xff] %vm165, %v158
    %168 = vst.msk [vmem:[#allocation2 + $0x10] sm:$0xff] %vm165, %v159
    %169 = vst.msk [vmem:[#allocation2 + $0x18] sm:$0xff] %vm165, %v160
    %170 = vst.msk [vmem:[#allocation2 + $0x20] sm:$0xff] %vm165, %v161
    %171 = vst.msk [vmem:[#allocation2 + $0x28] sm:$0xff] %vm165, %v162
    %172 = vst.msk [vmem:[#allocation2 + $0x30] sm:$0xff] %vm165, %v163
    %173 = vst.msk [vmem:[#allocation2 + $0x38] sm:$0xff] %vm165, %v164
    // Predicated region
    $region14: #{tpu_custom_call.1} parent=1 // pred_check
      _
    $region15: #{tpu_custom_call.1} parent=1 // pred_check_branch
      %175 = sbr.rel (0) target = $region17
    $region16: #{tpu_custom_call.1} parent=1 // pred_region
      %s177 = ssub.s32 1024, 1024
      %178 = vsyncadd [#allocation3], %s177
      %s179 = sshll.u32 [#allocation2], 4
      %s180 = int_to_ptr.vmem [resolvable:$true] %s179
      %185 = dma.vmem_to_hbm [thread:$0]  %s180, 1024, %s3, [#allocation3], 128, 128, 8
    $region17: #{tpu_custom_call.1} parent=1 // pred_fallthru
      _
    // Predicated region
    $region18: #{tpu_custom_call.1} parent=1 // pred_check
      _
    $region19: #{tpu_custom_call.1} parent=1 // pred_check_branch
      %187 = sbr.rel (0) target = $region21
    $region20: #{tpu_custom_call.1} parent=1 // pred_region
      %188 = dma.done [#allocation3], 1024
    $region21: #{tpu_custom_call.1} parent=1 // pred_fallthru
      _
    %189 = vsyncpa [#allocation3], 1

</llo_original>
